<compile_context>
chip_gen: v5e
topology: v5e:2x2
jax: 0.10.0
libtpu: 0.0.40
codegen_flags: <defaults>
</compile_context>

<pallas_src>
import functools

import jax
import jax.numpy as jnp
from jax.experimental import pallas as pl
from jax.experimental.pallas import tpu as pltpu

LANE = 128
SUBLANE = 8
DEFAULT_TILE_ROWS = 4096      # (4096, 128) f32 block = 2 MiB per operand


def _pow_const(base, gamma):
    """(base ** gamma) with integer-gamma specialization (no exp/log)."""
    g = float(gamma)
    if g.is_integer() and 0.0 <= g <= 8.0:
        gi = int(g)
        if gi == 0:
            return jnp.ones_like(base)
        out = base
        for _ in range(gi - 1):
            out = out * base
        return out
    return base ** g


def _fold_rows(v, op):
    """Fold a (R, 128) tile down to (8, 128) with `op` along the row groups."""
    r, c = v.shape
    return op(v.reshape(r // SUBLANE, SUBLANE, c), axis=0)


def _num_tensorcores():
    """Best-effort TensorCores-per-chip: 2 on v7x, 1 on v5e/v6e."""
    try:
        kind = jax.devices()[0].device_kind.lower()
    except Exception:
        return 1
    return 2 if "v7" in kind else 1


def _focal_reduce_kernel(x_ref, t_ref, out_ref,
                         acc_sig, acc_id, max_sc, min_sc,
                         *, n, n_full_blocks, alpha, gamma, eps,
                         tile_rows, steps_per_split):
    s = pl.program_id(0)   # split ("parallel"; one per TensorCore on v7x)
    i = pl.program_id(1)   # step within split ("arbitrary" / reduction)

    @pl.when(i == 0)
    def _init():
        acc_sig[...] = jnp.zeros_like(acc_sig)
        acc_id[...] = jnp.zeros_like(acc_id)
        max_sc[...] = jnp.full_like(max_sc, -jnp.inf)
        min_sc[...] = jnp.full_like(min_sc, jnp.inf)

    xf = x_ref[...].astype(jnp.float32)
    tf = t_ref[...].astype(jnp.float32)

    # Global (unclamped) block id; duplicate blocks from the clamped index_map
    # have blk >= nblocks >= n_full_blocks so they always take the masked path.
    blk = s * steps_per_split + i

    def accumulate(valid):
        if valid is None:                       # fast path: fully valid block
            x_s, t_s = xf, tf
            x_max_in, x_min_in = xf, xf
        else:                                   # masked path: ragged / pad / dup
            x_s = jnp.where(valid, xf, 0.5)
            t_s = jnp.where(valid, tf, 0.0)
            x_max_in = jnp.where(valid, xf, -jnp.inf)
            x_min_in = jnp.where(valid, xf, jnp.inf)

        # Running masked min/max of the raw inputs (global sigmoid condition).
        max_sc[...] = jnp.maximum(max_sc[...], _fold_rows(x_max_in, jnp.max))
        min_sc[...] = jnp.minimum(min_sc[...], _fold_rows(x_min_in, jnp.min))

        alpha_t = alpha * t_s + (1.0 - alpha) * (1.0 - t_s)

        def branch_loss(p):
            p = jnp.clip(p, eps, 1.0 - eps)
            pt = p * t_s + (1.0 - p) * (1.0 - t_s)
            fw = _pow_const(1.0 - pt, gamma)
            loss = -alpha_t * fw * jnp.log(pt)
            if valid is not None:
                loss = jnp.where(valid, loss, 0.0)
            return loss

        acc_sig[...] += _fold_rows(branch_loss(jax.nn.sigmoid(x_s)), jnp.sum)
        acc_id[...] += _fold_rows(branch_loss(x_s), jnp.sum)

    @pl.when(blk < n_full_blocks)
    def _fast():
        accumulate(None)

    @pl.when(blk >= n_full_blocks)
    def _masked():
        row = jax.lax.broadcasted_iota(jnp.int32, xf.shape, 0)
        col = jax.lax.broadcasted_iota(jnp.int32, xf.shape, 1)
        flat = (blk * tile_rows + row) * LANE + col
        accumulate(flat < n)

    @pl.when(i == pl.num_programs(1) - 1)
    def _finalize():
        out_ref[0, 0] = acc_sig[...]
        out_ref[0, 1] = acc_id[...]
        out_ref[0, 2] = max_sc[...]
        out_ref[0, 3] = min_sc[...]


def _focal_elementwise_kernel(flag_ref, x_ref, t_ref, o_ref,
                              *, alpha, gamma, eps):
    xf = x_ref[...].astype(jnp.float32)
    tf = t_ref[...].astype(jnp.float32)

    def compute(p):
        p = jnp.clip(p, eps, 1.0 - eps)
        pt = p * tf + (1.0 - p) * (1.0 - tf)
        fw = _pow_const(1.0 - pt, gamma)
        alpha_t = alpha * tf + (1.0 - alpha) * (1.0 - tf)
        return -alpha_t * fw * jnp.log(pt)

    use_sigmoid = flag_ref[0] > 0              # global flag, SMEM scalar

    @pl.when(use_sigmoid)
    def _sig():
        o_ref[...] = compute(jax.nn.sigmoid(xf))

    @pl.when(jnp.logical_not(use_sigmoid))
    def _ident():
        o_ref[...] = compute(xf)


def focal_loss(inputs, targets, *, alpha=0.25, gamma=2.0, reduction="mean",
               eps=1e-6):
    """JAX/Pallas equivalent of FocalLoss(alpha, gamma, reduction)(inputs, targets)."""
    if reduction not in ("mean", "sum", "none"):
        raise ValueError(f"unknown reduction: {reduction}")
    # TODO(synk): per-class tensor `alpha` (alpha[targets.long()]) not implemented;
    # scalar alpha only (matches the float/int branch of the PyTorch module).
    if not isinstance(alpha, (float, int)):
        raise NotImplementedError("focal_loss: tensor alpha not supported")

    x_flat = jnp.reshape(inputs, (-1,))
    t_flat = jnp.reshape(targets, (-1,))
    n = x_flat.shape[0]
    # In-kernel flat index / block-offset math is int32.
    if n >= 2**31 - 8 * DEFAULT_TILE_ROWS * LANE:
        raise ValueError("focal_loss: input too large for int32 in-kernel indexing")

    if reduction == "none":
        # Global sigmoid-branch decision: one fused min/max pass in XLA,
        # passed to the kernel as a prefetched SMEM scalar.
        flag = jnp.logical_or(jnp.max(x_flat) > 1.0,
                              jnp.min(x_flat) < 0.0).astype(jnp.int32).reshape(1)
    else:
        flag = None

    # Row alignment so sub-32-bit dtypes get clean packed vreg tiles
    # (8 rows f32, 16 rows bf16/f16, 32 rows int8/fp8).
    def _align(dt):
        return SUBLANE * max(1, 4 // jnp.dtype(dt).itemsize)
    row_align = max(_align(x_flat.dtype), _align(t_flat.dtype))

    # Pad (native dtype) so the flat vector is a lane-dense, row-aligned
    # (rows, 128) slab.  All masking of the pad happens in-kernel.
    rows = -(-n // LANE)
    rows_padded = -(-rows // row_align) * row_align
    pad = rows_padded * LANE - n
    if pad:
        x_flat = jnp.pad(x_flat, (0, pad))
        t_flat = jnp.pad(t_flat, (0, pad))
    x2 = x_flat.reshape(rows_padded, LANE)
    t2 = t_flat.reshape(rows_padded, LANE)

    tile_rows = min(DEFAULT_TILE_ROWS, rows_padded)
    nblocks = pl.cdiv(rows_padded, tile_rows)
    in_block_bytes = tile_rows * LANE * (x2.dtype.itemsize + t2.dtype.itemsize)

    if reduction == "none":
        # VMEM budget: 2 inputs + 1 f32 output, all double-buffered, + headroom.
        vmem_bytes = 2 * in_block_bytes + 2 * tile_rows * LANE * 4 + (4 << 20)
        kernel = functools.partial(_focal_elementwise_kernel,
                                   alpha=float(alpha), gamma=float(gamma),
                                   eps=float(eps))
        out = pl.pallas_call(
            kernel,
            out_shape=jax.ShapeDtypeStruct((rows_padded, LANE), jnp.float32),
            grid_spec=pltpu.PrefetchScalarGridSpec(
                num_scalar_prefetch=1,
                grid=(nblocks,),
                in_specs=[pl.BlockSpec((tile_rows, LANE), lambda i, f: (i, 0)),
                          pl.BlockSpec((tile_rows, LANE), lambda i, f: (i, 0))],
                out_specs=pl.BlockSpec((tile_rows, LANE), lambda i, f: (i, 0)),
            ),
            compiler_params=pltpu.CompilerParams(
                dimension_semantics=("parallel",),
                vmem_limit_bytes=int(min(vmem_bytes, 64 << 20))),
        )(flag, x2, t2)
        return out.reshape(-1)[:n]

    # mean / sum: per-split partial accumulators, combined in the wrapper.
    n_splits = min(_num_tensorcores(), nblocks)   # 2 only on dual-TC (v7x)
    steps = pl.cdiv(nblocks, n_splits)
    n_full_blocks = n // (tile_rows * LANE)       # blocks needing no mask

    def in_map(s, i):
        # Clamp so an over-provisioned last split never indexes past the array;
        # duplicated blocks are fully masked out in-kernel (blk >= n_full_blocks).
        return (jnp.minimum(s * steps + i, nblocks - 1), 0)

    # VMEM budget: 2 inputs double-buffered + tiny output/scratch + headroom.
    vmem_bytes = (2 * in_block_bytes
                  + 2 * 4 * SUBLANE * LANE * 4     # output block, double-buffered
                  + 4 * SUBLANE * LANE * 4         # scratch accumulators
                  + (4 << 20))

    kernel = functools.partial(_focal_reduce_kernel, n=n,
                               n_full_blocks=n_full_blocks,
                               alpha=float(alpha), gamma=float(gamma),
                               eps=float(eps), tile_rows=tile_rows,
                               steps_per_split=steps)
    parts = pl.pallas_call(
        kernel,
        out_shape=jax.ShapeDtypeStruct((n_splits, 4, SUBLANE, LANE),
                                       jnp.float32),
        grid_spec=pltpu.PrefetchScalarGridSpec(
            num_scalar_prefetch=0,
            grid=(n_splits, steps),
            in_specs=[pl.BlockSpec((tile_rows, LANE), in_map),
                      pl.BlockSpec((tile_rows, LANE), in_map)],
            out_specs=pl.BlockSpec((1, 4, SUBLANE, LANE),
                                   lambda s, i: (s, 0, 0, 0)),
            scratch_shapes=[pltpu.VMEM((SUBLANE, LANE), jnp.float32)] * 4,
        ),
        compiler_params=pltpu.CompilerParams(
            dimension_semantics=("parallel", "arbitrary"),
            vmem_limit_bytes=int(min(vmem_bytes, 64 << 20))),
    )(x2, t2)

    sum_sig = jnp.sum(parts[:, 0])
    sum_id = jnp.sum(parts[:, 1])
    use_sig = jnp.logical_or(jnp.max(parts[:, 2]) > 1.0,
                             jnp.min(parts[:, 3]) < 0.0)
    total = jnp.where(use_sig, sum_sig, sum_id)
    if reduction == "mean":
        return total / n
    return total


def _focal_loss_ref(inputs, targets, *, alpha=0.25, gamma=2.0,
                    reduction="mean", eps=1e-6):
    """Pure-JAX reference mirroring the PyTorch module."""
    x = jnp.reshape(inputs, (-1,)).astype(jnp.float32)
    t = jnp.reshape(targets, (-1,)).astype(jnp.float32)
    use_sig = jnp.logical_or(jnp.max(x) > 1.0, jnp.min(x) < 0.0)
    p = jnp.where(use_sig, jax.nn.sigmoid(x), x)
    p = jnp.clip(p, eps, 1.0 - eps)
    pt = p * t + (1.0 - p) * (1.0 - t)
    fw = (1.0 - pt) ** gamma
    at = alpha * t + (1.0 - alpha) * (1.0 - t)
    loss = -at * fw * jnp.log(pt)
    if reduction == "mean":
        return jnp.mean(loss)
    if reduction == "sum":
        return jnp.sum(loss)
    return loss


if __name__ == "__main__":
    key = jax.random.PRNGKey(0)
    k1, k2, k3 = jax.random.split(key, 3)

    # Case 1: logits outside [0, 1] -> sigmoid branch; ragged size; mean.
    batch = 200
    logits = jax.random.normal(k1, (batch, 1), dtype=jnp.float32) * 2.0
    targets = jax.random.bernoulli(k2, 0.3, (batch, 1)).astype(jnp.float32)
    out = jax.block_until_ready(focal_loss(logits, targets, reduction="mean"))
    ref = _focal_loss_ref(logits, targets, reduction="mean")
    assert jnp.allclose(out, ref, rtol=1e-5, atol=1e-6), (out, ref)

    # Case 2: values inside [0, 1] -> identity branch; sum reduction.
    probs = jax.random.uniform(k3, (batch,), dtype=jnp.float32)
    t1d = targets.reshape(-1)
    out2 = jax.block_until_ready(focal_loss(probs, t1d, reduction="sum"))
    ref2 = _focal_loss_ref(probs, t1d, reduction="sum")
    assert jnp.allclose(out2, ref2, rtol=1e-5, atol=1e-5), (out2, ref2)

    # Case 3: reduction='none' elementwise path (identity + sigmoid flag).
    out3 = jax.block_until_ready(focal_loss(logits, targets, reduction="none"))
    ref3 = _focal_loss_ref(logits, targets, reduction="none")
    assert out3.shape == (batch,)
    assert jnp.allclose(out3, ref3, rtol=1e-5, atol=1e-6)
    out3b = jax.block_until_ready(focal_loss(probs, t1d, reduction="none"))
    ref3b = _focal_loss_ref(probs, t1d, reduction="none")
    assert jnp.allclose(out3b, ref3b, rtol=1e-5, atol=1e-6)

    # Case 4: multi-block ragged size, bf16 inputs, mean (exercises the
    # fast-path / masked-path split and possible duplicate clamped blocks).
    n_big = 1_100_003
    kb1, kb2 = jax.random.split(k1)
    big_x = (jax.random.normal(kb1, (n_big,), dtype=jnp.float32) * 3.0
             ).astype(jnp.bfloat16)
    big_t = jax.random.bernoulli(kb2, 0.1, (n_big,)).astype(jnp.bfloat16)
    out4 = jax.block_until_ready(focal_loss(big_x, big_t, reduction="mean"))
    ref4 = _focal_loss_ref(big_x, big_t, reduction="mean")
    assert jnp.allclose(out4, ref4, rtol=1e-4, atol=1e-5), (out4, ref4)

    print("KERNEL_OK")
</pallas_src>

<mosaic_0001>
module attributes {stable_mosaic.version = 11 : i64} {
  func.func @_focal_reduce_kernel(%arg0: i32, %arg1: i32, %arg2: memref<8x128xf32, #tpu.memory_space<vmem>>, %arg3: memref<8x128xf32, #tpu.memory_space<vmem>>, %arg4: memref<1x4x8x128xf32, #tpu.memory_space<vmem>>, %arg5: memref<8x128xf32, #tpu.memory_space<vmem>>, %arg6: memref<8x128xf32, #tpu.memory_space<vmem>>, %arg7: memref<8x128xf32, #tpu.memory_space<vmem>>, %arg8: memref<8x128xf32, #tpu.memory_space<vmem>>) attributes {dimension_semantics = [#tpu.dimension_semantics<parallel>, #tpu.dimension_semantics<arbitrary>], iteration_bounds = array<i64: 1, 1>, scalar_prefetch = 0 : i64, scratch_operands = 4 : i64, tpu.core_type = #tpu.core_type<tc>, window_params = [{transform_indices = @transform_0, window_bounds = array<i64: 8, 128>}, {transform_indices = @transform_1, window_bounds = array<i64: 8, 128>}, {transform_indices = @transform_2, window_bounds = array<i64: 1, 4, 8, 128>}]} {
    %c0_i32 = arith.constant 0 : i32
    %0 = arith.cmpi eq, %arg1, %c0_i32 : i32
    %1 = arith.extui %0 : i1 to i32
    %c0_i32_0 = arith.constant 0 : i32
    %2 = arith.cmpi ne, %1, %c0_i32_0 : i32
    scf.if %2 {
      %cst = arith.constant 0.000000e+00 : f32
      %16 = vector.broadcast %cst : f32 to vector<8x128xf32>
      %c0_10 = arith.constant 0 : index
      %c0_11 = arith.constant 0 : index
      %17 = vector.load %arg5[%c0_10, %c0_11] : memref<8x128xf32, #tpu.memory_space<vmem>>, vector<8x128xf32>
      tpu.vector_store %arg5[%c0_10, %c0_11], %16 {strides = array<i32>} : memref<8x128xf32, #tpu.memory_space<vmem>>, vector<8x128xf32>,
      %cst_12 = arith.constant 0.000000e+00 : f32
      %18 = vector.broadcast %cst_12 : f32 to vector<8x128xf32>
      %c0_13 = arith.constant 0 : index
      %c0_14 = arith.constant 0 : index
      %19 = vector.load %arg6[%c0_13, %c0_14] : memref<8x128xf32, #tpu.memory_space<vmem>>, vector<8x128xf32>
      tpu.vector_store %arg6[%c0_13, %c0_14], %18 {strides = array<i32>} : memref<8x128xf32, #tpu.memory_space<vmem>>, vector<8x128xf32>,
      %cst_15 = arith.constant 0xFF800000 : f32
      %20 = vector.broadcast %cst_15 : f32 to vector<8x128xf32>
      %c0_16 = arith.constant 0 : index
      %c0_17 = arith.constant 0 : index
      %21 = vector.load %arg7[%c0_16, %c0_17] : memref<8x128xf32, #tpu.memory_space<vmem>>, vector<8x128xf32>
      tpu.vector_store %arg7[%c0_16, %c0_17], %20 {strides = array<i32>} : memref<8x128xf32, #tpu.memory_space<vmem>>, vector<8x128xf32>,
      %cst_18 = arith.constant 0x7F800000 : f32
      %22 = vector.broadcast %cst_18 : f32 to vector<8x128xf32>
      %c0_19 = arith.constant 0 : index
      %c0_20 = arith.constant 0 : index
      %23 = vector.load %arg8[%c0_19, %c0_20] : memref<8x128xf32, #tpu.memory_space<vmem>>, vector<8x128xf32>
      tpu.vector_store %arg8[%c0_19, %c0_20], %22 {strides = array<i32>} : memref<8x128xf32, #tpu.memory_space<vmem>>, vector<8x128xf32>,
    } else {
    }
    %c0 = arith.constant 0 : index
    %c0_1 = arith.constant 0 : index
    %3 = vector.load %arg2[%c0, %c0_1] : memref<8x128xf32, #tpu.memory_space<vmem>>, vector<8x128xf32>
    %c0_2 = arith.constant 0 : index
    %c0_3 = arith.constant 0 : index
    %4 = vector.load %arg3[%c0_2, %c0_3] : memref<8x128xf32, #tpu.memory_space<vmem>>, vector<8x128xf32>
    %c1_i32 = arith.constant 1 : i32
    %5 = arith.muli %arg0, %c1_i32 : i32
    %6 = arith.addi %5, %arg1 : i32
    %c0_i32_4 = arith.constant 0 : i32
    %7 = arith.cmpi slt, %6, %c0_i32_4 : i32
    %8 = arith.extui %7 : i1 to i32
    %c0_i32_5 = arith.constant 0 : i32
    %9 = arith.cmpi ne, %8, %c0_i32_5 : i32
    scf.if %9 {
      %c0_10 = arith.constant 0 : index
      %c0_11 = arith.constant 0 : index
      %16 = vector.load %arg7[%c0_10, %c0_11] : memref<8x128xf32, #tpu.memory_space<vmem>>, vector<8x128xf32>
      %17 = vector.shape_cast %3 : vector<8x128xf32> to vector<1x8x128xf32>
      %cst = arith.constant dense<0xFF800000> : vector<8x128xf32>
      %18 = vector.multi_reduction <maximumf>, %17, %cst [0] : vector<1x8x128xf32> to vector<8x128xf32>
      %19 = arith.maximumf %16, %18 : vector<8x128xf32>
      %c0_12 = arith.constant 0 : index
      %c0_13 = arith.constant 0 : index
      %20 = vector.load %arg7[%c0_12, %c0_13] : memref<8x128xf32, #tpu.memory_space<vmem>>, vector<8x128xf32>
      tpu.vector_store %arg7[%c0_12, %c0_13], %19 {strides = array<i32>} : memref<8x128xf32, #tpu.memory_space<vmem>>, vector<8x128xf32>,
      %c0_14 = arith.constant 0 : index
      %c0_15 = arith.constant 0 : index
      %21 = vector.load %arg8[%c0_14, %c0_15] : memref<8x128xf32, #tpu.memory_space<vmem>>, vector<8x128xf32>
      %22 = vector.shape_cast %3 : vector<8x128xf32> to vector<1x8x128xf32>
      %cst_16 = arith.constant dense<0x7F800000> : vector<8x128xf32>
      %23 = vector.multi_reduction <minimumf>, %22, %cst_16 [0] : vector<1x8x128xf32> to vector<8x128xf32>
      %24 = arith.minimumf %21, %23 : vector<8x128xf32>
      %c0_17 = arith.constant 0 : index
      %c0_18 = arith.constant 0 : index
      %25 = vector.load %arg8[%c0_17, %c0_18] : memref<8x128xf32, #tpu.memory_space<vmem>>, vector<8x128xf32>
      tpu.vector_store %arg8[%c0_17, %c0_18], %24 {strides = array<i32>} : memref<8x128xf32, #tpu.memory_space<vmem>>, vector<8x128xf32>,
      %cst_19 = arith.constant 2.500000e-01 : f32
      %26 = vector.broadcast %cst_19 : f32 to vector<8x128xf32>
      %27 = arith.mulf %26, %4 : vector<8x128xf32>
      %cst_20 = arith.constant 1.000000e+00 : f32
      %28 = vector.broadcast %cst_20 : f32 to vector<8x128xf32>
      %29 = arith.subf %28, %4 : vector<8x128xf32>
      %cst_21 = arith.constant 7.500000e-01 : f32
      %30 = vector.broadcast %cst_21 : f32 to vector<8x128xf32>
      %31 = arith.mulf %30, %29 : vector<8x128xf32>
      %32 = arith.addf %27, %31 : vector<8x128xf32>
      %c0_22 = arith.constant 0 : index
      %c0_23 = arith.constant 0 : index
      %33 = vector.load %arg5[%c0_22, %c0_23] : memref<8x128xf32, #tpu.memory_space<vmem>>, vector<8x128xf32>
      %34 = arith.negf %3 : vector<8x128xf32>
      %35 = math.exp %34 : vector<8x128xf32>
      %cst_24 = arith.constant 1.000000e+00 : f32
      %36 = vector.broadcast %cst_24 : f32 to vector<8x128xf32>
      %37 = arith.addf %36, %35 : vector<8x128xf32>
      %38 = arith.divf %36, %37 : vector<8x128xf32>
      %cst_25 = arith.constant 9.99999997E-7 : f32
      %cst_26 = arith.constant 0.999998986 : f32
      %39 = vector.broadcast %cst_25 : f32 to vector<8x128xf32>
      %40 = arith.maximumf %39, %38 : vector<8x128xf32>
      %41 = vector.broadcast %cst_26 : f32 to vector<8x128xf32>
      %42 = arith.minimumf %41, %40 : vector<8x128xf32>
      %43 = arith.mulf %42, %4 : vector<8x128xf32>
      %cst_27 = arith.constant 1.000000e+00 : f32
      %44 = vector.broadcast %cst_27 : f32 to vector<8x128xf32>
      %45 = arith.subf %44, %42 : vector<8x128xf32>
      %cst_28 = arith.constant 1.000000e+00 : f32
      %46 = vector.broadcast %cst_28 : f32 to vector<8x128xf32>
      %47 = arith.subf %46, %4 : vector<8x128xf32>
      %48 = arith.mulf %45, %47 : vector<8x128xf32>
      %49 = arith.addf %43, %48 : vector<8x128xf32>
      %cst_29 = arith.constant 1.000000e+00 : f32
      %50 = vector.broadcast %cst_29 : f32 to vector<8x128xf32>
      %51 = arith.subf %50, %49 : vector<8x128xf32>
      %52 = arith.mulf %51, %51 : vector<8x128xf32>
      %cst_30 = arith.constant 0.000000e+00 : f32
      %53 = vector.broadcast %cst_30 : f32 to vector<8x128xf32>
      %54 = arith.subf %53, %32 : vector<8x128xf32>
      %55 = arith.mulf %54, %52 : vector<8x128xf32>
      %56 = math.log %49 : vector<8x128xf32>
      %57 = arith.mulf %55, %56 : vector<8x128xf32>
      %58 = vector.shape_cast %57 : vector<8x128xf32> to vector<1x8x128xf32>
      %cst_31 = arith.constant dense<0.000000e+00> : vector<8x128xf32>
      %59 = vector.multi_reduction <add>, %58, %cst_31 [0] : vector<1x8x128xf32> to vector<8x128xf32>
      %60 = arith.addf %33, %59 : vector<8x128xf32>
      %c0_32 = arith.constant 0 : index
      %c0_33 = arith.constant 0 : index
      %61 = vector.load %arg5[%c0_32, %c0_33] : memref<8x128xf32, #tpu.memory_space<vmem>>, vector<8x128xf32>
      tpu.vector_store %arg5[%c0_32, %c0_33], %60 {strides = array<i32>} : memref<8x128xf32, #tpu.memory_space<vmem>>, vector<8x128xf32>,
      %c0_34 = arith.constant 0 : index
      %c0_35 = arith.constant 0 : index
      %62 = vector.load %arg6[%c0_34, %c0_35] : memref<8x128xf32, #tpu.memory_space<vmem>>, vector<8x128xf32>
      %cst_36 = arith.constant 9.99999997E-7 : f32
      %cst_37 = arith.constant 0.999998986 : f32
      %63 = vector.broadcast %cst_36 : f32 to vector<8x128xf32>
      %64 = arith.maximumf %63, %3 : vector<8x128xf32>
      %65 = vector.broadcast %cst_37 : f32 to vector<8x128xf32>
      %66 = arith.minimumf %65, %64 : vector<8x128xf32>
      %67 = arith.mulf %66, %4 : vector<8x128xf32>
      %cst_38 = arith.constant 1.000000e+00 : f32
      %68 = vector.broadcast %cst_38 : f32 to vector<8x128xf32>
      %69 = arith.subf %68, %66 : vector<8x128xf32>
      %cst_39 = arith.constant 1.000000e+00 : f32
      %70 = vector.broadcast %cst_39 : f32 to vector<8x128xf32>
      %71 = arith.subf %70, %4 : vector<8x128xf32>
      %72 = arith.mulf %69, %71 : vector<8x128xf32>
      %73 = arith.addf %67, %72 : vector<8x128xf32>
      %cst_40 = arith.constant 1.000000e+00 : f32
      %74 = vector.broadcast %cst_40 : f32 to vector<8x128xf32>
      %75 = arith.subf %74, %73 : vector<8x128xf32>
      %76 = arith.mulf %75, %75 : vector<8x128xf32>
      %cst_41 = arith.constant 0.000000e+00 : f32
      %77 = vector.broadcast %cst_41 : f32 to vector<8x128xf32>
      %78 = arith.subf %77, %32 : vector<8x128xf32>
      %79 = arith.mulf %78, %76 : vector<8x128xf32>
      %80 = math.log %73 : vector<8x128xf32>
      %81 = arith.mulf %79, %80 : vector<8x128xf32>
      %82 = vector.shape_cast %81 : vector<8x128xf32> to vector<1x8x128xf32>
      %cst_42 = arith.constant dense<0.000000e+00> : vector<8x128xf32>
      %83 = vector.multi_reduction <add>, %82, %cst_42 [0] : vector<1x8x128xf32> to vector<8x128xf32>
      %84 = arith.addf %62, %83 : vector<8x128xf32>
      %c0_43 = arith.constant 0 : index
      %c0_44 = arith.constant 0 : index
      %85 = vector.load %arg6[%c0_43, %c0_44] : memref<8x128xf32, #tpu.memory_space<vmem>>, vector<8x128xf32>
      tpu.vector_store %arg6[%c0_43, %c0_44], %84 {strides = array<i32>} : memref<8x128xf32, #tpu.memory_space<vmem>>, vector<8x128xf32>,
    } else {
    }
    %c0_i32_6 = arith.constant 0 : i32
    %10 = arith.cmpi sge, %6, %c0_i32_6 : i32
    %11 = arith.extui %10 : i1 to i32
    %c0_i32_7 = arith.constant 0 : i32
    %12 = arith.cmpi ne, %11, %c0_i32_7 : i32
    scf.if %12 {
      %16 = tpu.iota {dimensions = array<i32: 0>} : vector<8x128xi32>
      %17 = tpu.iota {dimensions = array<i32: 1>} : vector<8x128xi32>
      %c8_i32 = arith.constant 8 : i32
      %18 = arith.muli %6, %c8_i32 : i32
      %19 = vector.broadcast %18 : i32 to vector<8x128xi32>
      %20 = arith.addi %19, %16 : vector<8x128xi32>
      %c128_i32 = arith.constant 128 : i32
      %21 = vector.broadcast %c128_i32 : i32 to vector<8x128xi32>
      %22 = arith.muli %20, %21 : vector<8x128xi32>
      %23 = arith.addi %22, %17 : vector<8x128xi32>
      %c200_i32 = arith.constant 200 : i32
      %24 = vector.broadcast %c200_i32 : i32 to vector<8x128xi32>
      %25 = arith.cmpi slt, %23, %24 : vector<8x128xi32>
      %cst = arith.constant 5.000000e-01 : f32
      %26 = vector.broadcast %cst : f32 to vector<8x128xf32>
      %27 = arith.select %25, %3, %26 : vector<8x128xi1>, vector<8x128xf32>
      %cst_10 = arith.constant 0.000000e+00 : f32
      %28 = vector.broadcast %cst_10 : f32 to vector<8x128xf32>
      %29 = arith.select %25, %4, %28 : vector<8x128xi1>, vector<8x128xf32>
      %cst_11 = arith.constant 0xFF800000 : f32
      %30 = vector.broadcast %cst_11 : f32 to vector<8x128xf32>
      %31 = arith.select %25, %3, %30 : vector<8x128xi1>, vector<8x128xf32>
      %cst_12 = arith.constant 0x7F800000 : f32
      %32 = vector.broadcast %cst_12 : f32 to vector<8x128xf32>
      %33 = arith.select %25, %3, %32 : vector<8x128xi1>, vector<8x128xf32>
      %c0_13 = arith.constant 0 : index
      %c0_14 = arith.constant 0 : index
      %34 = vector.load %arg7[%c0_13, %c0_14] : memref<8x128xf32, #tpu.memory_space<vmem>>, vector<8x128xf32>
      %35 = vector.shape_cast %31 : vector<8x128xf32> to vector<1x8x128xf32>
      %cst_15 = arith.constant dense<0xFF800000> : vector<8x128xf32>
      %36 = vector.multi_reduction <maximumf>, %35, %cst_15 [0] : vector<1x8x128xf32> to vector<8x128xf32>
      %37 = arith.maximumf %34, %36 : vector<8x128xf32>
      %c0_16 = arith.constant 0 : index
      %c0_17 = arith.constant 0 : index
      %38 = vector.load %arg7[%c0_16, %c0_17] : memref<8x128xf32, #tpu.memory_space<vmem>>, vector<8x128xf32>
      tpu.vector_store %arg7[%c0_16, %c0_17], %37 {strides = array<i32>} : memref<8x128xf32, #tpu.memory_space<vmem>>, vector<8x128xf32>,
      %c0_18 = arith.constant 0 : index
      %c0_19 = arith.constant 0 : index
      %39 = vector.load %arg8[%c0_18, %c0_19] : memref<8x128xf32, #tpu.memory_space<vmem>>, vector<8x128xf32>
      %40 = vector.shape_cast %33 : vector<8x128xf32> to vector<1x8x128xf32>
      %cst_20 = arith.constant dense<0x7F800000> : vector<8x128xf32>
      %41 = vector.multi_reduction <minimumf>, %40, %cst_20 [0] : vector<1x8x128xf32> to vector<8x128xf32>
      %42 = arith.minimumf %39, %41 : vector<8x128xf32>
      %c0_21 = arith.constant 0 : index
      %c0_22 = arith.constant 0 : index
      %43 = vector.load %arg8[%c0_21, %c0_22] : memref<8x128xf32, #tpu.memory_space<vmem>>, vector<8x128xf32>
      tpu.vector_store %arg8[%c0_21, %c0_22], %42 {strides = array<i32>} : memref<8x128xf32, #tpu.memory_space<vmem>>, vector<8x128xf32>,
      %cst_23 = arith.constant 2.500000e-01 : f32
      %44 = vector.broadcast %cst_23 : f32 to vector<8x128xf32>
      %45 = arith.mulf %44, %29 : vector<8x128xf32>
      %cst_24 = arith.constant 1.000000e+00 : f32
      %46 = vector.broadcast %cst_24 : f32 to vector<8x128xf32>
      %47 = arith.subf %46, %29 : vector<8x128xf32>
      %cst_25 = arith.constant 7.500000e-01 : f32
      %48 = vector.broadcast %cst_25 : f32 to vector<8x128xf32>
      %49 = arith.mulf %48, %47 : vector<8x128xf32>
      %50 = arith.addf %45, %49 : vector<8x128xf32>
      %c0_26 = arith.constant 0 : index
      %c0_27 = arith.constant 0 : index
      %51 = vector.load %arg5[%c0_26, %c0_27] : memref<8x128xf32, #tpu.memory_space<vmem>>, vector<8x128xf32>
      %52 = arith.negf %27 : vector<8x128xf32>
      %53 = math.exp %52 : vector<8x128xf32>
      %cst_28 = arith.constant 1.000000e+00 : f32
      %54 = vector.broadcast %cst_28 : f32 to vector<8x128xf32>
      %55 = arith.addf %54, %53 : vector<8x128xf32>
      %56 = arith.divf %54, %55 : vector<8x128xf32>
      %cst_29 = arith.constant 9.99999997E-7 : f32
      %cst_30 = arith.constant 0.999998986 : f32
      %57 = vector.broadcast %cst_29 : f32 to vector<8x128xf32>
      %58 = arith.maximumf %57, %56 : vector<8x128xf32>
      %59 = vector.broadcast %cst_30 : f32 to vector<8x128xf32>
      %60 = arith.minimumf %59, %58 : vector<8x128xf32>
      %61 = arith.mulf %60, %29 : vector<8x128xf32>
      %cst_31 = arith.constant 1.000000e+00 : f32
      %62 = vector.broadcast %cst_31 : f32 to vector<8x128xf32>
      %63 = arith.subf %62, %60 : vector<8x128xf32>
      %cst_32 = arith.constant 1.000000e+00 : f32
      %64 = vector.broadcast %cst_32 : f32 to vector<8x128xf32>
      %65 = arith.subf %64, %29 : vector<8x128xf32>
      %66 = arith.mulf %63, %65 : vector<8x128xf32>
      %67 = arith.addf %61, %66 : vector<8x128xf32>
      %cst_33 = arith.constant 1.000000e+00 : f32
      %68 = vector.broadcast %cst_33 : f32 to vector<8x128xf32>
      %69 = arith.subf %68, %67 : vector<8x128xf32>
      %70 = arith.mulf %69, %69 : vector<8x128xf32>
      %cst_34 = arith.constant 0.000000e+00 : f32
      %71 = vector.broadcast %cst_34 : f32 to vector<8x128xf32>
      %72 = arith.subf %71, %50 : vector<8x128xf32>
      %73 = arith.mulf %72, %70 : vector<8x128xf32>
      %74 = math.log %67 : vector<8x128xf32>
      %75 = arith.mulf %73, %74 : vector<8x128xf32>
      %cst_35 = arith.constant 0.000000e+00 : f32
      %76 = vector.broadcast %cst_35 : f32 to vector<8x128xf32>
      %77 = arith.select %25, %75, %76 : vector<8x128xi1>, vector<8x128xf32>
      %78 = vector.shape_cast %77 : vector<8x128xf32> to vector<1x8x128xf32>
      %cst_36 = arith.constant dense<0.000000e+00> : vector<8x128xf32>
      %79 = vector.multi_reduction <add>, %78, %cst_36 [0] : vector<1x8x128xf32> to vector<8x128xf32>
      %80 = arith.addf %51, %79 : vector<8x128xf32>
      %c0_37 = arith.constant 0 : index
      %c0_38 = arith.constant 0 : index
      %81 = vector.load %arg5[%c0_37, %c0_38] : memref<8x128xf32, #tpu.memory_space<vmem>>, vector<8x128xf32>
      tpu.vector_store %arg5[%c0_37, %c0_38], %80 {strides = array<i32>} : memref<8x128xf32, #tpu.memory_space<vmem>>, vector<8x128xf32>,
      %c0_39 = arith.constant 0 : index
      %c0_40 = arith.constant 0 : index
      %82 = vector.load %arg6[%c0_39, %c0_40] : memref<8x128xf32, #tpu.memory_space<vmem>>, vector<8x128xf32>
      %cst_41 = arith.constant 9.99999997E-7 : f32
      %cst_42 = arith.constant 0.999998986 : f32
      %83 = vector.broadcast %cst_41 : f32 to vector<8x128xf32>
      %84 = arith.maximumf %83, %27 : vector<8x128xf32>
      %85 = vector.broadcast %cst_42 : f32 to vector<8x128xf32>
      %86 = arith.minimumf %85, %84 : vector<8x128xf32>
      %87 = arith.mulf %86, %29 : vector<8x128xf32>
      %cst_43 = arith.constant 1.000000e+00 : f32
      %88 = vector.broadcast %cst_43 : f32 to vector<8x128xf32>
      %89 = arith.subf %88, %86 : vector<8x128xf32>
      %cst_44 = arith.constant 1.000000e+00 : f32
      %90 = vector.broadcast %cst_44 : f32 to vector<8x128xf32>
      %91 = arith.subf %90, %29 : vector<8x128xf32>
      %92 = arith.mulf %89, %91 : vector<8x128xf32>
      %93 = arith.addf %87, %92 : vector<8x128xf32>
      %cst_45 = arith.constant 1.000000e+00 : f32
      %94 = vector.broadcast %cst_45 : f32 to vector<8x128xf32>
      %95 = arith.subf %94, %93 : vector<8x128xf32>
      %96 = arith.mulf %95, %95 : vector<8x128xf32>
      %cst_46 = arith.constant 0.000000e+00 : f32
      %97 = vector.broadcast %cst_46 : f32 to vector<8x128xf32>
      %98 = arith.subf %97, %50 : vector<8x128xf32>
      %99 = arith.mulf %98, %96 : vector<8x128xf32>
      %100 = math.log %93 : vector<8x128xf32>
      %101 = arith.mulf %99, %100 : vector<8x128xf32>
      %cst_47 = arith.constant 0.000000e+00 : f32
      %102 = vector.broadcast %cst_47 : f32 to vector<8x128xf32>
      %103 = arith.select %25, %101, %102 : vector<8x128xi1>, vector<8x128xf32>
      %104 = vector.shape_cast %103 : vector<8x128xf32> to vector<1x8x128xf32>
      %cst_48 = arith.constant dense<0.000000e+00> : vector<8x128xf32>
      %105 = vector.multi_reduction <add>, %104, %cst_48 [0] : vector<1x8x128xf32> to vector<8x128xf32>
      %106 = arith.addf %82, %105 : vector<8x128xf32>
      %c0_49 = arith.constant 0 : index
      %c0_50 = arith.constant 0 : index
      %107 = vector.load %arg6[%c0_49, %c0_50] : memref<8x128xf32, #tpu.memory_space<vmem>>, vector<8x128xf32>
      tpu.vector_store %arg6[%c0_49, %c0_50], %106 {strides = array<i32>} : memref<8x128xf32, #tpu.memory_space<vmem>>, vector<8x128xf32>,
    } else {
    }
    %c0_i32_8 = arith.constant 0 : i32
    %13 = arith.cmpi eq, %arg1, %c0_i32_8 : i32
    %14 = arith.extui %13 : i1 to i32
    %c0_i32_9 = arith.constant 0 : i32
    %15 = arith.cmpi ne, %14, %c0_i32_9 : i32
    scf.if %15 {
      %c0_10 = arith.constant 0 : index
      %c0_11 = arith.constant 0 : index
      %16 = vector.load %arg5[%c0_10, %c0_11] : memref<8x128xf32, #tpu.memory_space<vmem>>, vector<8x128xf32>
      %c0_12 = arith.constant 0 : index
      %c0_13 = arith.constant 0 : index
      %c0_14 = arith.constant 0 : index
      %c0_15 = arith.constant 0 : index
      %17 = vector.load %arg4[%c0_12, %c0_13, %c0_14, %c0_15] : memref<1x4x8x128xf32, #tpu.memory_space<vmem>>, vector<1x1x8x128xf32>
      %18 = vector.shape_cast %17 : vector<1x1x8x128xf32> to vector<8x128xf32>
      %19 = vector.shape_cast %16 : vector<8x128xf32> to vector<1x1x8x128xf32>
      tpu.vector_store %arg4[%c0_12, %c0_13, %c0_14, %c0_15], %19 {strides = array<i32>} : memref<1x4x8x128xf32, #tpu.memory_space<vmem>>, vector<1x1x8x128xf32>,
      %c0_16 = arith.constant 0 : index
      %c0_17 = arith.constant 0 : index
      %20 = vector.load %arg6[%c0_16, %c0_17] : memref<8x128xf32, #tpu.memory_space<vmem>>, vector<8x128xf32>
      %c0_18 = arith.constant 0 : index
      %c1 = arith.constant 1 : index
      %c0_19 = arith.constant 0 : index
      %c0_20 = arith.constant 0 : index
      %21 = vector.load %arg4[%c0_18, %c1, %c0_19, %c0_20] : memref<1x4x8x128xf32, #tpu.memory_space<vmem>>, vector<1x1x8x128xf32>
      %22 = vector.shape_cast %21 : vector<1x1x8x128xf32> to vector<8x128xf32>
      %23 = vector.shape_cast %20 : vector<8x128xf32> to vector<1x1x8x128xf32>
      tpu.vector_store %arg4[%c0_18, %c1, %c0_19, %c0_20], %23 {strides = array<i32>} : memref<1x4x8x128xf32, #tpu.memory_space<vmem>>, vector<1x1x8x128xf32>,
      %c0_21 = arith.constant 0 : index
      %c0_22 = arith.constant 0 : index
      %24 = vector.load %arg7[%c0_21, %c0_22] : memref<8x128xf32, #tpu.memory_space<vmem>>, vector<8x128xf32>
      %c0_23 = arith.constant 0 : index
      %c2 = arith.constant 2 : index
      %c0_24 = arith.constant 0 : index
      %c0_25 = arith.constant 0 : index
      %25 = vector.load %arg4[%c0_23, %c2, %c0_24, %c0_25] : memref<1x4x8x128xf32, #tpu.memory_space<vmem>>, vector<1x1x8x128xf32>
      %26 = vector.shape_cast %25 : vector<1x1x8x128xf32> to vector<8x128xf32>
      %27 = vector.shape_cast %24 : vector<8x128xf32> to vector<1x1x8x128xf32>
      tpu.vector_store %arg4[%c0_23, %c2, %c0_24, %c0_25], %27 {strides = array<i32>} : memref<1x4x8x128xf32, #tpu.memory_space<vmem>>, vector<1x1x8x128xf32>,
      %c0_26 = arith.constant 0 : index
      %c0_27 = arith.constant 0 : index
      %28 = vector.load %arg8[%c0_26, %c0_27] : memref<8x128xf32, #tpu.memory_space<vmem>>, vector<8x128xf32>
      %c0_28 = arith.constant 0 : index
      %c3 = arith.constant 3 : index
      %c0_29 = arith.constant 0 : index
      %c0_30 = arith.constant 0 : index
      %29 = vector.load %arg4[%c0_28, %c3, %c0_29, %c0_30] : memref<1x4x8x128xf32, #tpu.memory_space<vmem>>, vector<1x1x8x128xf32>
      %30 = vector.shape_cast %29 : vector<1x1x8x128xf32> to vector<8x128xf32>
      %31 = vector.shape_cast %28 : vector<8x128xf32> to vector<1x1x8x128xf32>
      tpu.vector_store %arg4[%c0_28, %c3, %c0_29, %c0_30], %31 {strides = array<i32>} : memref<1x4x8x128xf32, #tpu.memory_space<vmem>>, vector<1x1x8x128xf32>,
    } else {
    }
    return
  }
  func.func @transform_0(%arg0: i32, %arg1: i32) -> (i32, i32) {
    %c1_i32 = arith.constant 1 : i32
    %0 = arith.muli %arg0, %c1_i32 : i32
    %1 = arith.addi %0, %arg1 : i32
    %c0_i32 = arith.constant 0 : i32
    %2 = arith.minsi %1, %c0_i32 : i32
    %c0_i32_0 = arith.constant 0 : i32
    %c0_i32_1 = arith.constant 0 : i32
    return %2, %c0_i32_0 : i32, i32
  }
  func.func @transform_1(%arg0: i32, %arg1: i32) -> (i32, i32) {
    %c1_i32 = arith.constant 1 : i32
    %0 = arith.muli %arg0, %c1_i32 : i32
    %1 = arith.addi %0, %arg1 : i32
    %c0_i32 = arith.constant 0 : i32
    %2 = arith.minsi %1, %c0_i32 : i32
    %c0_i32_0 = arith.constant 0 : i32
    %c0_i32_1 = arith.constant 0 : i32
    return %2, %c0_i32_0 : i32, i32
  }
  func.func @transform_2(%arg0: i32, %arg1: i32) -> (i32, i32, i32, i32) {
    %c0_i32 = arith.constant 0 : i32
    %c0_i32_0 = arith.constant 0 : i32
    %c0_i32_1 = arith.constant 0 : i32
    %c0_i32_2 = arith.constant 0 : i32
    return %arg0, %c0_i32, %c0_i32_0, %c0_i32_1 : i32, i32, i32, i32
  }
}

</mosaic_0001>

<llo_original>
// kernel: tpu_custom_call.1
$region0: #{tpu_custom_call.1}
  #allocation0 [shape = 'u32[]', space=smem, size = 0x4, offset = 0x4, fixed_abs, tag = 'smem constant byte address 0x4 - core index']
  #allocation1 [shape = 'u32[72,128]{1,0:T(1,128)}', space=vmem, size = 0x9000, scoped, tag = 'internal scratch']
  #allocation2 [shape = 'f32[8,128]{1,0:T(8,128)}', space=vmem, size = 0x1000, scoped, tag = 'scratch operand']
  #allocation3 [shape = 'f32[8,128]{1,0:T(8,128)}', space=vmem, size = 0x1000, scoped, tag = 'scratch operand']
  #allocation4 [shape = 'f32[8,128]{1,0:T(8,128)}', space=vmem, size = 0x1000, scoped, tag = 'scratch operand']
  #allocation5 [shape = 'f32[8,128]{1,0:T(8,128)}', space=vmem, size = 0x1000, scoped, tag = 'scratch operand']
  %s0 = inlined_call_operand.hbm [shape: f32[8,128], index: 0, kind: input, shape index: {}]
  %s1 = inlined_call_operand.hbm [shape: f32[8,128], index: 1, kind: input, shape index: {}]
  %s2 = inlined_call_operand.hbm [shape: f32[1,4,8,128], index: 2, kind: output, shape index: {}]
  %s3 = sld [smem:[#allocation0]]
  $region42: #{tpu_custom_call.1} parent=0
    _
  %s5 = ssub.s32 1, %s3
  %s6 = scalar_select 0, %s5, %s3
  $region1: #{tpu_custom_call.1} parent=0
    #allocation6 [shape = 'u8[4096]{0}', space=vmem, size = 0x1000, scoped, tag = 'input window, operand 0, single buffered']
    #allocation7 [shape = 's32[1]{0}', space=sflag, size = 0x4, scoped, tag = 'scoped memory for tpu_custom_call.1']
    #allocation8 [shape = 's32[1]{0}', space=sflag, size = 0x4, scoped, tag = 'scoped memory for tpu_custom_call.1']
    #allocation9 [shape = 'u8[4096]{0}', space=vmem, size = 0x1000, scoped, tag = 'input window, operand 1, single buffered']
    #allocation10 [shape = 's32[1]{0}', space=sflag, size = 0x4, scoped, tag = 'scoped memory for tpu_custom_call.1']
    #allocation11 [shape = 'u8[16384]{0}', space=vmem, size = 0x4000, scoped, tag = 'output window, operand 0, single buffered']
    %7 = vsyncpa [#allocation7], 0
    %8 = vsyncpa [#allocation10], 0
    %9 = vsyncpa [#allocation8], 0
    // Predicated region
    $region2: #{tpu_custom_call.1} parent=1 // pred_check
      _
    $region3: #{tpu_custom_call.1} parent=1 // pred_check_branch
      %11 = sbr.rel (0) target = $region5
    $region4: #{tpu_custom_call.1} parent=1 // pred_region
      %s12 = sadd.s32 0, 0
      %p13 = scmp.lt.s32.totalorder %s12, 0
      %s14 = scalar_select %p13, %s12, 0
      %16 = vsyncadd [#allocation7], 0
      %s17 = smul.addr %s14, 8
      %s18 = scalar_lea.hbm %s0, %s17
      %s20 = sshll.u32 %s18, 4
      %s21 = int_to_ptr.hbm [resolvable:$true] %s20
      %s22 = sshll.u32 [#allocation6], 4
      %s23 = int_to_ptr.vmem [resolvable:$true] %s22
      %25 = dma.hbm_to_vmem [thread:$0]  %s21, 128, %s23, [#allocation7]
    $region5: #{tpu_custom_call.1} parent=1 // pred_fallthru
      _
    // Predicated region
    $region6: #{tpu_custom_call.1} parent=1 // pred_check
      _
    $region7: #{tpu_custom_call.1} parent=1 // pred_check_branch
      %27 = sbr.rel (0) target = $region9
    $region8: #{tpu_custom_call.1} parent=1 // pred_region
      %s28 = sadd.s32 0, 0
      %p29 = scmp.lt.s32.totalorder %s28, 0
      %s30 = scalar_select %p29, %s28, 0
      %32 = vsyncadd [#allocation10], 0
      %s33 = smul.addr %s30, 8
      %s34 = scalar_lea.hbm %s1, %s33
      %s36 = sshll.u32 %s34, 4
      %s37 = int_to_ptr.hbm [resolvable:$true] %s36
      %s38 = sshll.u32 [#allocation9], 4
      %s39 = int_to_ptr.vmem [resolvable:$true] %s38
      %41 = dma.hbm_to_vmem [thread:$0]  %s37, 128, %s39, [#allocation10]
    $region9: #{tpu_custom_call.1} parent=1 // pred_fallthru
      _
    // Predicated region
    $region10: #{tpu_custom_call.1} parent=1 // pred_check
      _
    $region11: #{tpu_custom_call.1} parent=1 // pred_check_branch
      %43 = sbr.rel (0) target = $region13
    $region12: #{tpu_custom_call.1} parent=1 // pred_region
      %45 = dma.done [#allocation7], 128
    $region13: #{tpu_custom_call.1} parent=1 // pred_fallthru
      _
    // Predicated region
    $region14: #{tpu_custom_call.1} parent=1 // pred_check
      _
    $region15: #{tpu_custom_call.1} parent=1 // pred_check_branch
      %47 = sbr.rel (0) target = $region17
    $region16: #{tpu_custom_call.1} parent=1 // pred_region
      %49 = dma.done [#allocation10], 128
    $region17: #{tpu_custom_call.1} parent=1 // pred_fallthru
      _
    %s50 = sadd.s32 0, 0
    %p51 = scmp.lt.s32.totalorder %s50, 0
    %s52 = scalar_select %p51, %s50, 0
    %s53 = sadd.s32 0, 0
    %p54 = scmp.lt.s32.totalorder %s53, 0
    %s55 = scalar_select %p54, %s53, 0
    %p56 = scmp.eq.s32.totalorder 0, 0
    // Predicated region
    $region18: #{tpu_custom_call.1} parent=1 // pred_check
      %p57 = pneg %p56
    $region19: #{tpu_custom_call.1} parent=1 // pred_check_branch
      %59 = sbr.rel (%p57) target = $region21
    $region20: #{tpu_custom_call.1} parent=1 // pred_region
      %60 = vst [vmem:[#allocation2] sm:$0xff] 0.0
      %61 = vst [vmem:[#allocation3] sm:$0xff] 0.0
      %62 = vst [vmem:[#allocation4] sm:$0xff] -inf
      %63 = vst [vmem:[#allocation5] sm:$0xff] inf
    $region21: #{tpu_custom_call.1} parent=1 // pred_fallthru
      _
    %v64 = vld [vmem:[#allocation6] sm:$0xff]
    %v65 = vld [vmem:[#allocation9] sm:$0xff]
    %s66 = sadd.s32 0, 0
    %p67 = scmp.lt.s32.totalorder %s66, 0
    // Predicated region
    $region22: #{tpu_custom_call.1} parent=1 // pred_check
      %p68 = pneg %p67
    $region23: #{tpu_custom_call.1} parent=1 // pred_check_branch
      %70 = sbr.rel (%p68) target = $region25
    $region24: #{tpu_custom_call.1} parent=1 // pred_region
      %v71 = vld [vmem:[#allocation4] sm:$0xff]
      %v72 = vmax.f32 %v71, %v64
      %73 = vst [vmem:[#allocation4] sm:$0xff] %v72
      %v74 = vld [vmem:[#allocation5] sm:$0xff]
      %v75 = vmin.f32 %v74, %v64
      %76 = vst [vmem:[#allocation5] sm:$0xff] %v75
      %v77 = vmul.f32 %v65, 0.25
      %v78 = vsub.f32 1.0, %v65
      %v79 = vmul.f32 %v78, 0.75
      %v80 = vadd.f32 %v77, %v79
      %v81 = vld [vmem:[#allocation2] sm:$0xff]
      %v82 = vxor.u32 %v64, 2147483648
      %v83 = vmul.f32 %v82, 1.442695
      %v84 = vpow.pop %v83
      %v85 = vadd.f32 %v84, 1.0
      %v86 = vrcp.pop %v85
      %v87 = vmul.f32 %v85, %v86
      %v88 = vsub.f32 1.0, %v87
      %v89 = vmul.f32 %v86, %v88
      %v90 = vadd.f32 %v86, %v89
      %vm91 = vweird.f32 %v85
      %vm92 = vweird.f32 %v86
      %vm93 = vmor %vm91, %vm92
      %v94 = vsel %vm93, %v86, %v90
      %v95 = vand.u32 2147483647, %v85
      %vm96 = vcmp.eq.f32.partialorder %v95, 8.507059e+37
      %v97 = vand.u32 %v85, 2147483648
      %v98 = vor.u32 1.1754944e-38, %v97
      %v99 = vsel %vm96, %v98, %v94
      %v100 = vmul.f32 1.0, %v99
      %v101 = vmax.f32 %v100, 1e-06
      %v102 = vmin.f32 %v101, 0.999999
      %v103 = vmul.f32 %v102, %v65
      %v104 = vsub.f32 1.0, %v102
      %v105 = vmul.f32 %v104, %v78
      %v106 = vadd.f32 %v103, %v105
      %v107 = vsub.f32 1.0, %v106
      %v108 = vmul.f32 %v107, %v107
      %v109 = vsub.f32 0.0, %v80
      %v110 = vmul.f32 %v109, %v108
      %v111 = vlog2.pop %v106
      %v112 = vmul.f32 %v111, 0.6931472
      %v113 = vmul.f32 %v110, %v112
      %v114 = vadd.f32 %v113, 0.0
      %v115 = vadd.f32 %v81, %v114
      %116 = vst [vmem:[#allocation2] sm:$0xff] %v115
      %v117 = vld [vmem:[#allocation3] sm:$0xff]
      %v118 = vmax.f32 %v64, 1e-06
      %v119 = vmin.f32 %v118, 0.999999
      %v120 = vmul.f32 %v119, %v65
      %v121 = vsub.f32 1.0, %v119
      %v122 = vmul.f32 %v121, %v78
      %v123 = vadd.f32 %v120, %v122
      %v124 = vsub.f32 1.0, %v123
      %v125 = vmul.f32 %v124, %v124
      %v126 = vmul.f32 %v109, %v125
      %v127 = vlog2.pop %v123
      %v128 = vmul.f32 %v127, 0.6931472
      %v129 = vmul.f32 %v126, %v128
      %v130 = vadd.f32 %v129, 0.0
      %v131 = vadd.f32 %v117, %v130
      %132 = vst [vmem:[#allocation3] sm:$0xff] %v131
    $region25: #{tpu_custom_call.1} parent=1 // pred_fallthru
      _
    %p133 = scmp.ge.s32.totalorder %s66, 0
    // Predicated region
    $region26: #{tpu_custom_call.1} parent=1 // pred_check
      %p134 = pneg %p133
    $region27: #{tpu_custom_call.1} parent=1 // pred_check_branch
      %136 = sbr.rel (%p134) target = $region29
    $region28: #{tpu_custom_call.1} parent=1 // pred_region
      %v137 = vlaneseq
      %v138 = vshrl.u32 %v137, 7
      %v139 = vlaneseq
      %v140 = vand.u32 %v139, 127
      %s141 = smul.u32 %s66, 8
      %v142 = vstv %s141
      %v143 = vadd.s32 %v142, %v138
      %v144 = vmul.u32 %v143, 128
      %v145 = vadd.s32 %v144, %v140
      %vm146 = vcmp.lt.s32.totalorder %v145, 200
      %v147 = vsel %vm146, %v64, 0.5
      %v148 = vsel %vm146, %v65, 0.0
      %v149 = vsel %vm146, %v64, -inf
      %v150 = vsel %vm146, %v64, inf
      %v151 = vld [vmem:[#allocation4] sm:$0xff]
      %v152 = vmax.f32 %v151, %v149
      %153 = vst [vmem:[#allocation4] sm:$0xff] %v152
      %v154 = vld [vmem:[#allocation5] sm:$0xff]
      %v155 = vmin.f32 %v154, %v150
      %156 = vst [vmem:[#allocation5] sm:$0xff] %v155
      %v157 = vmul.f32 %v148, 0.25
      %v158 = vsub.f32 1.0, %v148
      %v159 = vmul.f32 %v158, 0.75
      %v160 = vadd.f32 %v157, %v159
      %v161 = vld [vmem:[#allocation2] sm:$0xff]
      %v162 = vxor.u32 %v147, 2147483648
      %v163 = vmul.f32 %v162, 1.442695
      %v164 = vpow.pop %v163
      %v165 = vadd.f32 %v164, 1.0
      %v166 = vrcp.pop %v165
      %v167 = vmul.f32 %v165, %v166
      %v168 = vsub.f32 1.0, %v167
      %v169 = vmul.f32 %v166, %v168
      %v170 = vadd.f32 %v166, %v169
      %vm171 = vweird.f32 %v165
      %vm172 = vweird.f32 %v166
      %vm173 = vmor %vm171, %vm172
      %v174 = vsel %vm173, %v166, %v170
      %v175 = vand.u32 2147483647, %v165
      %vm176 = vcmp.eq.f32.partialorder %v175, 8.507059e+37
      %v177 = vand.u32 %v165, 2147483648
      %v178 = vor.u32 1.1754944e-38, %v177
      %v179 = vsel %vm176, %v178, %v174
      %v180 = vmul.f32 1.0, %v179
      %v181 = vmax.f32 %v180, 1e-06
      %v182 = vmin.f32 %v181, 0.999999
      %v183 = vmul.f32 %v182, %v148
      %v184 = vsub.f32 1.0, %v182
      %v185 = vmul.f32 %v184, %v158
      %v186 = vadd.f32 %v183, %v185
      %v187 = vsub.f32 1.0, %v186
      %v188 = vmul.f32 %v187, %v187
      %v189 = vsub.f32 0.0, %v160
      %v190 = vmul.f32 %v189, %v188
      %v191 = vlog2.pop %v186
      %v192 = vmul.f32 %v191, 0.6931472
      %v193 = vmul.f32 %v190, %v192
      %v194 = vsel %vm146, %v193, 0.0
      %v195 = vadd.f32 %v194, 0.0
      %v196 = vadd.f32 %v161, %v195
      %197 = vst [vmem:[#allocation2] sm:$0xff] %v196
      %v198 = vld [vmem:[#allocation3] sm:$0xff]
      %v199 = vmax.f32 %v147, 1e-06
      %v200 = vmin.f32 %v199, 0.999999
      %v201 = vmul.f32 %v200, %v148
      %v202 = vsub.f32 1.0, %v200
      %v203 = vmul.f32 %v202, %v158
      %v204 = vadd.f32 %v201, %v203
      %v205 = vsub.f32 1.0, %v204
      %v206 = vmul.f32 %v205, %v205
      %v207 = vmul.f32 %v189, %v206
      %v208 = vlog2.pop %v204
      %v209 = vmul.f32 %v208, 0.6931472
      %v210 = vmul.f32 %v207, %v209
      %v211 = vsel %vm146, %v210, 0.0
      %v212 = vadd.f32 %v211, 0.0
      %v213 = vadd.f32 %v198, %v212
      %214 = vst [vmem:[#allocation3] sm:$0xff] %v213
    $region29: #{tpu_custom_call.1} parent=1 // pred_fallthru
      _
    // Predicated region
    $region30: #{tpu_custom_call.1} parent=1 // pred_check
      %p215 = pneg %p56
    $region31: #{tpu_custom_call.1} parent=1 // pred_check_branch
      %217 = sbr.rel (%p215) target = $region33
    $region32: #{tpu_custom_call.1} parent=1 // pred_region
      %v218 = vld [vmem:[#allocation2] sm:$0xff]
      %219 = vst [vmem:[#allocation11] sm:$0xff] %v218
      %v220 = vld [vmem:[#allocation3] sm:$0xff]
      %s221 = scalar_lea.vmem [#allocation11], 8
      %222 = vst [vmem:[%s221] sm:$0xff] %v220
      %v223 = vld [vmem:[#allocation4] sm:$0xff]
      %s224 = scalar_lea.vmem [#allocation11], 16
      %225 = vst [vmem:[%s224] sm:$0xff] %v223
      %v226 = vld [vmem:[#allocation5] sm:$0xff]
      %s227 = scalar_lea.vmem [#allocation11], 24
      %228 = vst [vmem:[%s227] sm:$0xff] %v226
    $region33: #{tpu_custom_call.1} parent=1 // pred_fallthru
      _
    // Predicated region
    $region34: #{tpu_custom_call.1} parent=1 // pred_check
      _
    $region35: #{tpu_custom_call.1} parent=1 // pred_check_branch
      %230 = sbr.rel (0) target = $region37
    $region36: #{tpu_custom_call.1} parent=1 // pred_region
      %232 = vsyncadd [#allocation8], 0
      %s233 = sshll.u32 [#allocation11], 4
      %s234 = int_to_ptr.vmem [resolvable:$true] %s233
      %s235 = sshll.u32 %s2, 4
      %s236 = int_to_ptr.hbm [resolvable:$true] %s235
      %241 = dma.vmem_to_hbm [thread:$0]  %s234, 512, %s236, [#allocation8], 128, 128, 8
    $region37: #{tpu_custom_call.1} parent=1 // pred_fallthru
      _
    // Predicated region
    $region38: #{tpu_custom_call.1} parent=1 // pred_check
      _
    $region39: #{tpu_custom_call.1} parent=1 // pred_check_branch
      %243 = sbr.rel (0) target = $region41
    $region40: #{tpu_custom_call.1} parent=1 // pred_region
      %245 = dma.done [#allocation8], 512
    $region41: #{tpu_custom_call.1} parent=1 // pred_fallthru
      _
    %246 = vsyncpa [#allocation7], 1
    %247 = vsyncpa [#allocation10], 1
    %248 = vsyncpa [#allocation8], 1

</llo_original>
